<compile_context>
chip_gen: v6e
topology: v6e:2x2x1
jax: 0.10.0
libtpu: 0.0.40
codegen_flags: <defaults>
</compile_context>

<pallas_src>
import numpy as np
import jax
import jax.numpy as jnp
from jax.experimental import pallas as pl
from jax.experimental.pallas import tpu as pltpu

V = 32         # vocab size (blank_id = 0)
D = 32         # encoder / decoder hidden dim
H = 64         # FFN hidden dim
MAX_U = 64     # max (padded) prediction-prefix length fed to the kernel
BEAM_TILE = 8  # hypotheses scored per pallas_call (grid axis)

# Packed-weight layout: one (W_ROWS, 128) f32 array.  All sublane offsets are
# multiples of 8 and all lane slices start at lane 0 (cheap static ref views).
R_EMB = 0      # rows   0..31 : embedding table (V, D)
R_Q   = 32     # rows  32..63 : wq  (D, D)
R_KV  = 64     # rows  64..95 : [wk | wv] (D, 2D)
R_WO  = 96     # rows  96..127: wo  (D, D)
R_W1  = 128    # rows 128..159: w1  (D, H)
R_W2  = 160    # rows 160..223: w2  (H, D)
R_WC  = 224    # rows 224..255: wc  (D, V)
R_BC  = 256    # rows 256..263: bc  broadcast to (8, V)
W_ROWS = 264
W_COLS = 128

_SCALE = 1.0 / float(np.sqrt(D))


def _pn_step_kernel(len_ref,    # SMEM (BEAM_TILE,) int32 : #valid tokens per hyp (0 => skip)
                    toks_ref,   # VMEM (MAX_U, 1) int32   : padded token prefix (this hyp)
                    ctx_ref,    # VMEM (1, D) f32         : precomputed cross-attn context
                    w_ref,      # VMEM (W_ROWS, W_COLS)   : packed decoder weights
                    out_ref):   # VMEM (1, V) f32         : log-probs for this hyp
    b = pl.program_id(0)
    L = len_ref[b]

    @pl.when(L > 0)   # padded tile rows carry length 0 and are skipped entirely
    def _():
        # --- embedding via one-hot matmul (needed for all rows: K/V prefix) ---
        toks = toks_ref[...]                                              # (MAX_U, 1) i32
        vocab_iota = jax.lax.broadcasted_iota(jnp.int32, (MAX_U, V), 1)
        onehot = (vocab_iota == toks).astype(jnp.float32)                 # (MAX_U, V)
        emb = w_ref[R_EMB:R_EMB + V, 0:D]                                 # (V, D)
        x = jnp.dot(onehot, emb, preferred_element_type=jnp.float32)      # (MAX_U, D)

        # --- select the last valid position of x (only row L-1 feeds the output) ---
        pos_iota = jax.lax.broadcasted_iota(jnp.int32, (MAX_U, 1), 0)     # (MAX_U, 1)
        sel = (pos_iota == (L - 1)).astype(jnp.float32)
        x_last = jnp.sum(sel * x, axis=0, keepdims=True)                  # (1, D)

        # --- causal length-masked self-attention, query = row L-1 only ---
        w_kv = w_ref[R_KV:R_KV + D, 0:2 * D]                              # (D, 2D) fused k|v
        kv = jnp.dot(x, w_kv, preferred_element_type=jnp.float32)         # (MAX_U, 2D)
        k = kv[:, 0:D]
        v = kv[:, D:2 * D]
        w_q = w_ref[R_Q:R_Q + D, 0:D]
        q = jnp.dot(x_last, w_q, preferred_element_type=jnp.float32)      # (1, D)

        scores = jnp.sum(k * q, axis=-1, keepdims=True) * _SCALE          # (MAX_U, 1)
        scores = jnp.where(pos_iota < L, scores, jnp.float32(-1e30))
        m = jnp.max(scores, axis=0, keepdims=True)                        # (1, 1)
        p = jnp.exp(scores - m)                                           # (MAX_U, 1)
        denom = jnp.sum(p, axis=0, keepdims=True)                         # (1, 1)
        inv = pl.reciprocal(denom, approx=True)                           # EUP, nearly free
        attn = jnp.sum(p * v, axis=0, keepdims=True) * inv                # (1, D)

        w_o = w_ref[R_WO:R_WO + D, 0:D]
        h1 = x_last + jnp.dot(attn, w_o, preferred_element_type=jnp.float32)

        # --- cross-attention context (hoisted outside the kernel: ctx = enc @ wv2 @ wo2) ---
        h2 = h1 + ctx_ref[...]                                            # (1, D)

        # --- feed-forward (row L-1 only) ---
        w_1 = w_ref[R_W1:R_W1 + D, 0:H]
        w_2 = w_ref[R_W2:R_W2 + H, 0:D]
        ff = jnp.maximum(jnp.dot(h2, w_1, preferred_element_type=jnp.float32), 0.0)
        h3 = h2 + jnp.dot(ff, w_2, preferred_element_type=jnp.float32)    # (1, D)

        # --- classifier + exact log-softmax ---
        w_c = w_ref[R_WC:R_WC + D, 0:V]
        bias = w_ref[R_BC:R_BC + 8, 0:V]                                  # (8, V), rows equal
        logits = jnp.dot(h3, w_c, preferred_element_type=jnp.float32) + bias[0:1, :]
        lmax = jnp.max(logits, axis=-1, keepdims=True)
        lse = jnp.log(jnp.sum(jnp.exp(logits - lmax), axis=-1, keepdims=True)) + lmax
        out_ref[...] = logits - lse


class PNScorer:
    """Packs decoder weights, precomputes cross-attn ctx, and runs the fused
    PN-step + classifier + log_softmax Pallas kernel on a tile of hypotheses."""

    def __init__(self, params):
        wpack = np.zeros((W_ROWS, W_COLS), dtype=np.float32)
        wpack[R_EMB:R_EMB + V, 0:D] = np.asarray(params["emb"], dtype=np.float32)
        wpack[R_Q:R_Q + D, 0:D] = np.asarray(params["wq"], dtype=np.float32)
        wpack[R_KV:R_KV + D, 0:D] = np.asarray(params["wk"], dtype=np.float32)
        wpack[R_KV:R_KV + D, D:2 * D] = np.asarray(params["wv"], dtype=np.float32)
        wpack[R_WO:R_WO + D, 0:D] = np.asarray(params["wo"], dtype=np.float32)
        wpack[R_W1:R_W1 + D, 0:H] = np.asarray(params["w1"], dtype=np.float32)
        wpack[R_W2:R_W2 + H, 0:D] = np.asarray(params["w2"], dtype=np.float32)
        wpack[R_WC:R_WC + D, 0:V] = np.asarray(params["wc"], dtype=np.float32)
        wpack[R_BC:R_BC + 8, 0:V] = np.broadcast_to(
            np.asarray(params["bc"], dtype=np.float32).reshape(1, V), (8, V))
        self._wpack = jnp.asarray(wpack)
        # Cross-attention over a single encoder frame collapses to enc @ (wv2 @ wo2).
        self._w_ctx = jnp.asarray(params["wv2"]) @ jnp.asarray(params["wo2"])   # (D, D)

        grid_spec = pltpu.PrefetchScalarGridSpec(
            num_scalar_prefetch=1,            # lengths -> SMEM
            grid=(BEAM_TILE,),
            in_specs=[
                pl.BlockSpec((None, MAX_U, 1), lambda b, lens: (b, 0, 0)),   # tokens
                pl.BlockSpec((None, 1, D), lambda b, lens: (b, 0, 0)),       # ctx
                pl.BlockSpec((W_ROWS, W_COLS), lambda b, lens: (0, 0)),      # packed weights
            ],
            out_specs=pl.BlockSpec((None, 1, V), lambda b, lens: (b, 0, 0)),
        )
        call = pl.pallas_call(
            _pn_step_kernel,
            out_shape=jax.ShapeDtypeStruct((BEAM_TILE, 1, V), jnp.float32),
            grid_spec=grid_spec,
            compiler_params=pltpu.CompilerParams(
                dimension_semantics=("parallel",)),   # 2 TCs on v7x; no-op on v5e/v6e
        )
        wpack_dev = self._wpack
        self._score = jax.jit(
            lambda lengths, tokens, ctx: call(lengths, tokens, ctx, wpack_dev))

    def precompute_ctx(self, tn_output):
        """ctx[b, t] = tn_output[b, t] @ wv2 @ wo2, computed once per utterance."""
        ctx = jnp.einsum("btd,de->bte",
                         jnp.asarray(tn_output, dtype=jnp.float32), self._w_ctx)
        return np.asarray(ctx)   # (B, T, D) host copy for cheap per-request slicing

    def score_tile(self, lengths, tokens, ctx):
        """lengths (BEAM_TILE,), tokens (BEAM_TILE, MAX_U, 1), ctx (BEAM_TILE, 1, D)."""
        return self._score(lengths, tokens, ctx)   # (BEAM_TILE, 1, V) device array


class StreamingBeamSearcher:
    """JAX/Pallas port of SpeechBrain's StreamingBeamSearcher (beam_size > 1 path).

    The per-batch-item beam searches are run in lockstep so that all pending
    prediction-network scoring requests of a given while-iteration are batched
    into a single Pallas kernel launch.  Per-item semantics are identical to the
    reference (items are independent)."""

    def __init__(self, scorer, blank_id=0, beam_size=4, nbest=5,
                 lm_module=None, lm_weight=0.0, state_beam=2.3,
                 expand_beam=2.3, max_steps=10):
        self.scorer = scorer
        self.blank_id = blank_id
        self.beam_size = beam_size
        self.nbest = nbest
        self.lm = lm_module
        self.lm_weight = lm_weight
        if lm_module is None and lm_weight > 0:
            raise ValueError("Language model is not provided.")
        self.state_beam = state_beam
        self.expand_beam = expand_beam
        self.max_steps = max_steps
        # TODO(synk): transducer_greedy_decode path (beam_size <= 1) not ported;
        # the reference itself marks it unsupported.
        # TODO(synk): LM fusion (lm_weight > 0) not ported.
        # TODO(synk): per-hypothesis K/V cache via input_output_aliases ('hidden_dec')
        # not implemented; the prefix K/V is recomputed per scoring call.

    def __call__(self, tn_output):
        return self.transducer_beam_search_decode(tn_output)

    def _score_requests(self, requests, ctx_all, t_step):
        """Batch-score a list of (i_batch, hyp) requests; returns np (n_req, V)."""
        outs = []
        for start in range(0, len(requests), BEAM_TILE):
            chunk = requests[start:start + BEAM_TILE]
            lengths = np.zeros((BEAM_TILE,), dtype=np.int32)   # 0 => skipped in kernel
            tokens = np.zeros((BEAM_TILE, MAX_U, 1), dtype=np.int32)
            ctx = np.zeros((BEAM_TILE, 1, D), dtype=np.float32)
            for r, (i_batch, hyp) in enumerate(chunk):
                pred = hyp["prediction"]
                assert len(pred) <= MAX_U, "prediction prefix exceeds MAX_U"
                lengths[r] = len(pred)
                tokens[r, :len(pred), 0] = np.asarray(pred, dtype=np.int32)
                ctx[r, 0, :] = ctx_all[i_batch, t_step]
            log_probs = self.scorer.score_tile(lengths, tokens, ctx)
            outs.append(np.asarray(log_probs)[:len(chunk), 0, :])   # one D2H per tile
        return np.concatenate(outs, axis=0)

    def transducer_beam_search_decode(self, tn_output):
        B, T, _ = np.asarray(tn_output.shape)
        ctx_all = self.scorer.precompute_ctx(tn_output)   # (B, T, D), once per utterance

        norm = lambda x: x["logp_score"] / len(x["prediction"])
        beams = [[{"prediction": [self.blank_id], "logp_score": 0.0, "hidden_dec": None}]
                 for _ in range(B)]

        for t_step in range(T):
            states = [{"process": beams[i], "beam": [], "steps": 1, "active": True}
                      for i in range(B)]
            while True:
                requests = []   # (i_batch, a_best_hyp) pending kernel scores
                for i, st in enumerate(states):
                    if not st["active"]:
                        continue
                    if len(st["beam"]) >= self.beam_size:
                        st["active"] = False
                        continue
                    if st["steps"] >= self.max_steps:
                        st["beam"] = st["process"]
                        st["active"] = False
                        continue
                    st["steps"] += 1
                    a_best_hyp = max(st["process"], key=norm)
                    if len(st["beam"]) > 0:
                        b_best_hyp = max(st["beam"], key=norm)
                        if b_best_hyp["logp_score"] >= self.state_beam + a_best_hyp["logp_score"]:
                            st["active"] = False
                            continue
                    st["process"].remove(a_best_hyp)
                    requests.append((i, a_best_hyp))
                if not requests:
                    break

                log_probs_all = self._score_requests(requests, ctx_all, t_step)

                for (i, a_best_hyp), log_probs in zip(requests, log_probs_all):
                    st = states[i]
                    positions = np.argsort(-log_probs)[: self.beam_size]
                    logp_targets = log_probs[positions]
                    best_logp = (logp_targets[0]
                                 if positions[0] != self.blank_id
                                 else logp_targets[1])
                    for j in range(len(positions)):
                        topk_hyp = {
                            "prediction": a_best_hyp["prediction"][:],
                            "logp_score": a_best_hyp["logp_score"] + float(logp_targets[j]),
                            "hidden_dec": a_best_hyp["hidden_dec"],
                        }
                        if positions[j] == self.blank_id:
                            st["beam"].append(topk_hyp)
                            continue
                        if logp_targets[j] >= best_logp - self.expand_beam:
                            topk_hyp["prediction"].append(int(positions[j]))
                            st["process"].append(topk_hyp)
            beams = [st["beam"] for st in states]

        nbest_batch, nbest_batch_score = [], []
        for i in range(B):
            nbest_hyps = sorted(beams[i], key=norm, reverse=True)[: self.nbest]
            nbest_batch.append([h["prediction"][1:] for h in nbest_hyps])
            nbest_batch_score.append([norm(h) for h in nbest_hyps])

        best_scores = jnp.asarray([s[0] for s in nbest_batch_score], dtype=jnp.float32)
        return ([nb[0] for nb in nbest_batch],
                jnp.exp(best_scores).mean(),
                nbest_batch,
                nbest_batch_score)


if __name__ == "__main__":
    key = jax.random.PRNGKey(0)
    keys = jax.random.split(key, 12)

    def init(k, shape, scale=0.02):
        return scale * jax.random.normal(k, shape, dtype=jnp.float32)

    params = {
        "emb": init(keys[0], (V, D)),
        "wq": init(keys[1], (D, D)),
        "wk": init(keys[2], (D, D)),
        "wv": init(keys[3], (D, D)),
        "wo": init(keys[4], (D, D)),
        "wv2": init(keys[5], (D, D)),
        "wo2": init(keys[6], (D, D)),
        "w1": init(keys[7], (D, H)),
        "w2": init(keys[8], (H, D)),
        "wc": init(keys[9], (D, V)),
        "bc": jnp.zeros((1, V), dtype=jnp.float32),
    }

    scorer = PNScorer(params)
    searcher = StreamingBeamSearcher(
        scorer, blank_id=0, beam_size=4, nbest=5,
        lm_module=None, lm_weight=0.0,
        state_beam=2.3, expand_beam=2.3, max_steps=10)

    B, T = 2, 4
    tn_output = jax.random.normal(keys[10], (B, T, D), dtype=jnp.float32)

    hyps, avg_score, nbest_batch, nbest_batch_score = searcher(tn_output)
    jax.block_until_ready(avg_score)
    print("KERNEL_OK")
</pallas_src>

<mosaic_0001>
module attributes {stable_mosaic.version = 11 : i64} {
  func.func @_pn_step_kernel(%arg0: i32, %arg1: memref<8xi32, #tpu.memory_space<smem>>, %arg2: memref<1x64x1xi32, #tpu.memory_space<vmem>>, %arg3: memref<1x1x32xf32, #tpu.memory_space<vmem>>, %arg4: memref<264x128xf32, #tpu.memory_space<vmem>>, %arg5: memref<1x1x32xf32, #tpu.memory_space<vmem>>) attributes {dimension_semantics = [#tpu.dimension_semantics<parallel>], iteration_bounds = array<i64: 8>, scalar_prefetch = 1 : i64, scratch_operands = 0 : i64, tpu.core_type = #tpu.core_type<tc>, window_params = [{transform_indices = @transform_0, window_bounds = array<i64: 1, 64, 1>}, {transform_indices = @transform_1, window_bounds = array<i64: 1, 1, 32>}, {pipeline_mode = #tpu.pipeline_mode<synchronous>, transform_indices = @transform_2, window_bounds = array<i64: 264, 128>}, {transform_indices = @transform_3, window_bounds = array<i64: 1, 1, 32>}]} {
    %0 = arith.index_cast %arg0 : i32 to index
    %1 = memref.load %arg1[%0] : memref<8xi32, #tpu.memory_space<smem>>
    %c0_i32 = arith.constant 0 : i32
    %2 = arith.cmpi sgt, %1, %c0_i32 : i32
    %3 = arith.extui %2 : i1 to i32
    %c0_i32_0 = arith.constant 0 : i32
    %4 = arith.cmpi ne, %3, %c0_i32_0 : i32
    scf.if %4 {
      %c0 = arith.constant 0 : index
      %c0_1 = arith.constant 0 : index
      %c0_2 = arith.constant 0 : index
      %5 = vector.load %arg2[%c0, %c0_1, %c0_2] : memref<1x64x1xi32, #tpu.memory_space<vmem>>, vector<1x64x1xi32>
      %6 = vector.shape_cast %5 : vector<1x64x1xi32> to vector<64x1xi32>
      %7 = tpu.iota {dimensions = array<i32: 1>} : vector<64x32xi32>
      %8 = vector.broadcast %6 : vector<64x1xi32> to vector<64x32xi32>
      %9 = arith.cmpi eq, %7, %8 : vector<64x32xi32>
      %10 = arith.extui %9 : vector<64x32xi1> to vector<64x32xi32>
      %11 = arith.sitofp %10 : vector<64x32xi32> to vector<64x32xf32>
      %c0_3 = arith.constant 0 : index
      %c0_4 = arith.constant 0 : index
      %12 = vector.load %arg4[%c0_3, %c0_4] : memref<264x128xf32, #tpu.memory_space<vmem>>, vector<32x32xf32>
      %cst = arith.constant dense<0.000000e+00> : vector<64x32xf32>
      %13 = tpu.matmul %11, %12, %cst {dimension_numbers = #tpu.dot_dimension_numbers<[1], [0], [0], [1], [0, 0, 1, 1], [], []>} : vector<64x32xf32>, vector<32x32xf32>, vector<64x32xf32> -> vector<64x32xf32>
      %14 = tpu.iota {dimensions = array<i32: 0>} : vector<64x1xi32>
      %c1_i32 = arith.constant 1 : i32
      %15 = arith.subi %1, %c1_i32 : i32
      %16 = vector.broadcast %15 : i32 to vector<64x1xi32>
      %17 = arith.cmpi eq, %14, %16 : vector<64x1xi32>
      %18 = arith.extui %17 : vector<64x1xi1> to vector<64x1xi32>
      %19 = arith.sitofp %18 : vector<64x1xi32> to vector<64x1xf32>
      %20 = vector.broadcast %19 : vector<64x1xf32> to vector<64x32xf32>
      %21 = arith.mulf %20, %13 : vector<64x32xf32>
      %cst_5 = arith.constant dense<0.000000e+00> : vector<32xf32>
      %22 = vector.multi_reduction <add>, %21, %cst_5 [0] : vector<64x32xf32> to vector<32xf32>
      %23 = vector.shape_cast %22 : vector<32xf32> to vector<1x32xf32>
      %c64 = arith.constant 64 : index
      %c0_6 = arith.constant 0 : index
      %24 = vector.load %arg4[%c64, %c0_6] : memref<264x128xf32, #tpu.memory_space<vmem>>, vector<32x64xf32>
      %cst_7 = arith.constant dense<0.000000e+00> : vector<64x64xf32>
      %25 = tpu.matmul %13, %24, %cst_7 {dimension_numbers = #tpu.dot_dimension_numbers<[1], [0], [0], [1], [0, 0, 1, 1], [], []>} : vector<64x32xf32>, vector<32x64xf32>, vector<64x64xf32> -> vector<64x64xf32>
      %26 = vector.extract_strided_slice %25 {offsets = [0, 0], sizes = [64, 32], strides = [1, 1]} : vector<64x64xf32> to vector<64x32xf32>
      %27 = vector.extract_strided_slice %25 {offsets = [0, 32], sizes = [64, 32], strides = [1, 1]} : vector<64x64xf32> to vector<64x32xf32>
      %c32 = arith.constant 32 : index
      %c0_8 = arith.constant 0 : index
      %28 = vector.load %arg4[%c32, %c0_8] : memref<264x128xf32, #tpu.memory_space<vmem>>, vector<32x32xf32>
      %cst_9 = arith.constant dense<0.000000e+00> : vector<1x32xf32>
      %29 = tpu.matmul %23, %28, %cst_9 {dimension_numbers = #tpu.dot_dimension_numbers<[1], [0], [0], [1], [0, 0, 1, 1], [], []>} : vector<1x32xf32>, vector<32x32xf32>, vector<1x32xf32> -> vector<1x32xf32>
      %30 = vector.broadcast %29 : vector<1x32xf32> to vector<64x32xf32>
      %31 = arith.mulf %26, %30 : vector<64x32xf32>
      %cst_10 = arith.constant dense<0.000000e+00> : vector<64xf32>
      %32 = vector.multi_reduction <add>, %31, %cst_10 [1] : vector<64x32xf32> to vector<64xf32>
      %33 = vector.shape_cast %32 : vector<64xf32> to vector<64x1xf32>
      %cst_11 = arith.constant 0.176776692 : f32
      %34 = vector.broadcast %cst_11 : f32 to vector<64x1xf32>
      %35 = arith.mulf %33, %34 : vector<64x1xf32>
      %36 = vector.broadcast %1 : i32 to vector<64x1xi32>
      %37 = arith.cmpi slt, %14, %36 : vector<64x1xi32>
      %cst_12 = arith.constant -1.000000e+30 : f32
      %38 = vector.broadcast %cst_12 : f32 to vector<64x1xf32>
      %39 = arith.select %37, %35, %38 : vector<64x1xi1>, vector<64x1xf32>
      %cst_13 = arith.constant dense<0xFF800000> : vector<1xf32>
      %40 = vector.multi_reduction <maximumf>, %39, %cst_13 [0] : vector<64x1xf32> to vector<1xf32>
      %41 = vector.shape_cast %40 : vector<1xf32> to vector<1x1xf32>
      %42 = vector.broadcast %41 : vector<1x1xf32> to vector<64x1xf32>
      %43 = arith.subf %39, %42 : vector<64x1xf32>
      %44 = math.exp %43 : vector<64x1xf32>
      %cst_14 = arith.constant dense<0.000000e+00> : vector<1xf32>
      %45 = vector.multi_reduction <add>, %44, %cst_14 [0] : vector<64x1xf32> to vector<1xf32>
      %46 = vector.shape_cast %45 : vector<1xf32> to vector<1x1xf32>
      %47 = tpu.reciprocal %46 {approx = true} : vector<1x1xf32> -> vector<1x1xf32>
      %48 = vector.broadcast %44 : vector<64x1xf32> to vector<64x32xf32>
      %49 = arith.mulf %48, %27 : vector<64x32xf32>
      %cst_15 = arith.constant dense<0.000000e+00> : vector<32xf32>
      %50 = vector.multi_reduction <add>, %49, %cst_15 [0] : vector<64x32xf32> to vector<32xf32>
      %51 = vector.shape_cast %50 : vector<32xf32> to vector<1x32xf32>
      %52 = vector.broadcast %47 : vector<1x1xf32> to vector<1x32xf32>
      %53 = arith.mulf %51, %52 : vector<1x32xf32>
      %c96 = arith.constant 96 : index
      %c0_16 = arith.constant 0 : index
      %54 = vector.load %arg4[%c96, %c0_16] : memref<264x128xf32, #tpu.memory_space<vmem>>, vector<32x32xf32>
      %cst_17 = arith.constant dense<0.000000e+00> : vector<1x32xf32>
      %55 = tpu.matmul %53, %54, %cst_17 {dimension_numbers = #tpu.dot_dimension_numbers<[1], [0], [0], [1], [0, 0, 1, 1], [], []>} : vector<1x32xf32>, vector<32x32xf32>, vector<1x32xf32> -> vector<1x32xf32>
      %56 = arith.addf %23, %55 : vector<1x32xf32>
      %c0_18 = arith.constant 0 : index
      %c0_19 = arith.constant 0 : index
      %c0_20 = arith.constant 0 : index
      %57 = vector.load %arg3[%c0_18, %c0_19, %c0_20] : memref<1x1x32xf32, #tpu.memory_space<vmem>>, vector<1x1x32xf32>
      %58 = vector.shape_cast %57 : vector<1x1x32xf32> to vector<1x32xf32>
      %59 = arith.addf %56, %58 : vector<1x32xf32>
      %c128 = arith.constant 128 : index
      %c0_21 = arith.constant 0 : index
      %60 = vector.load %arg4[%c128, %c0_21] : memref<264x128xf32, #tpu.memory_space<vmem>>, vector<32x64xf32>
      %c160 = arith.constant 160 : index
      %c0_22 = arith.constant 0 : index
      %61 = vector.load %arg4[%c160, %c0_22] : memref<264x128xf32, #tpu.memory_space<vmem>>, vector<64x32xf32>
      %cst_23 = arith.constant dense<0.000000e+00> : vector<1x64xf32>
      %62 = tpu.matmul %59, %60, %cst_23 {dimension_numbers = #tpu.dot_dimension_numbers<[1], [0], [0], [1], [0, 0, 1, 1], [], []>} : vector<1x32xf32>, vector<32x64xf32>, vector<1x64xf32> -> vector<1x64xf32>
      %cst_24 = arith.constant 0.000000e+00 : f32
      %63 = vector.broadcast %cst_24 : f32 to vector<1x64xf32>
      %64 = arith.maximumf %62, %63 : vector<1x64xf32>
      %cst_25 = arith.constant dense<0.000000e+00> : vector<1x32xf32>
      %65 = tpu.matmul %64, %61, %cst_25 {dimension_numbers = #tpu.dot_dimension_numbers<[1], [0], [0], [1], [0, 0, 1, 1], [], []>} : vector<1x64xf32>, vector<64x32xf32>, vector<1x32xf32> -> vector<1x32xf32>
      %66 = arith.addf %59, %65 : vector<1x32xf32>
      %c224 = arith.constant 224 : index
      %c0_26 = arith.constant 0 : index
      %67 = vector.load %arg4[%c224, %c0_26] : memref<264x128xf32, #tpu.memory_space<vmem>>, vector<32x32xf32>
      %c256 = arith.constant 256 : index
      %c0_27 = arith.constant 0 : index
      %68 = vector.load %arg4[%c256, %c0_27] : memref<264x128xf32, #tpu.memory_space<vmem>>, vector<8x32xf32>
      %cst_28 = arith.constant dense<0.000000e+00> : vector<1x32xf32>
      %69 = tpu.matmul %66, %67, %cst_28 {dimension_numbers = #tpu.dot_dimension_numbers<[1], [0], [0], [1], [0, 0, 1, 1], [], []>} : vector<1x32xf32>, vector<32x32xf32>, vector<1x32xf32> -> vector<1x32xf32>
      %70 = vector.extract_strided_slice %68 {offsets = [0, 0], sizes = [1, 32], strides = [1, 1]} : vector<8x32xf32> to vector<1x32xf32>
      %71 = arith.addf %69, %70 : vector<1x32xf32>
      %cst_29 = arith.constant dense<0xFF800000> : vector<1xf32>
      %72 = vector.multi_reduction <maximumf>, %71, %cst_29 [1] : vector<1x32xf32> to vector<1xf32>
      %73 = vector.shape_cast %72 : vector<1xf32> to vector<1x1xf32>
      %74 = vector.broadcast %73 : vector<1x1xf32> to vector<1x32xf32>
      %75 = arith.subf %71, %74 : vector<1x32xf32>
      %76 = math.exp %75 : vector<1x32xf32>
      %cst_30 = arith.constant dense<0.000000e+00> : vector<1xf32>
      %77 = vector.multi_reduction <add>, %76, %cst_30 [1] : vector<1x32xf32> to vector<1xf32>
      %78 = vector.shape_cast %77 : vector<1xf32> to vector<1x1xf32>
      %79 = math.log %78 : vector<1x1xf32>
      %80 = arith.addf %79, %73 : vector<1x1xf32>
      %81 = vector.broadcast %80 : vector<1x1xf32> to vector<1x32xf32>
      %82 = arith.subf %71, %81 : vector<1x32xf32>
      %c0_31 = arith.constant 0 : index
      %c0_32 = arith.constant 0 : index
      %c0_33 = arith.constant 0 : index
      %83 = vector.load %arg5[%c0_31, %c0_32, %c0_33] : memref<1x1x32xf32, #tpu.memory_space<vmem>>, vector<1x1x32xf32>
      %84 = vector.shape_cast %83 : vector<1x1x32xf32> to vector<1x32xf32>
      %85 = vector.shape_cast %82 : vector<1x32xf32> to vector<1x1x32xf32>
      tpu.vector_store %arg5[%c0_31, %c0_32, %c0_33], %85 {strides = array<i32>} : memref<1x1x32xf32, #tpu.memory_space<vmem>>, vector<1x1x32xf32>,
    } else {
    }
    return
  }
  func.func @transform_0(%arg0: i32, %arg1: memref<8xi32, #tpu.memory_space<smem>>) -> (i32, i32, i32) {
    %c0_i32 = arith.constant 0 : i32
    %c0_i32_0 = arith.constant 0 : i32
    %c0_i32_1 = arith.constant 0 : i32
    return %arg0, %c0_i32, %c0_i32_0 : i32, i32, i32
  }
  func.func @transform_1(%arg0: i32, %arg1: memref<8xi32, #tpu.memory_space<smem>>) -> (i32, i32, i32) {
    %c0_i32 = arith.constant 0 : i32
    %c0_i32_0 = arith.constant 0 : i32
    %c0_i32_1 = arith.constant 0 : i32
    return %arg0, %c0_i32, %c0_i32_0 : i32, i32, i32
  }
  func.func @transform_2(%arg0: i32, %arg1: memref<8xi32, #tpu.memory_space<smem>>) -> (i32, i32) {
    %c0_i32 = arith.constant 0 : i32
    %c0_i32_0 = arith.constant 0 : i32
    %c0_i32_1 = arith.constant 0 : i32
    return %c0_i32, %c0_i32_0 : i32, i32
  }
  func.func @transform_3(%arg0: i32, %arg1: memref<8xi32, #tpu.memory_space<smem>>) -> (i32, i32, i32) {
    %c0_i32 = arith.constant 0 : i32
    %c0_i32_0 = arith.constant 0 : i32
    %c0_i32_1 = arith.constant 0 : i32
    return %arg0, %c0_i32, %c0_i32_0 : i32, i32, i32
  }
}

</mosaic_0001>

<llo_original>
// kernel: _lambda_.1
$region0: #{_lambda_.1}
  #allocation0 [shape = 'u32[]', space=smem, size = 0x4, offset = 0x4, fixed_abs, tag = 'smem constant byte address 0x4 - core index']
  #allocation1 [shape = 'u32[144,128]{1,0:T(1,128)}', space=vmem, size = 0x12000, scoped, tag = 'internal scratch']
  #allocation2 [shape = 's32[1]{0}', space=sflag, size = 0x4, scoped, tag = 'scoped memory for _lambda_.1']
  #allocation3 [shape = 'u8[512]{0}', space=smem, size = 0x200, scoped, tag = 'prefetched SMEM operand 0']
  %s0 = inlined_call_operand.vmem [shape: s32[8], index: 0, kind: input, shape index: {}]
  %s1 = inlined_call_operand.vmem [shape: s32[8,64,1], index: 1, kind: input, shape index: {}]
  %s2 = inlined_call_operand.vmem [shape: f32[8,1,32], index: 2, kind: input, shape index: {}]
  %s3 = inlined_call_operand.vmem [shape: f32[264,128], index: 3, kind: input, shape index: {}]
  %s4 = inlined_call_operand.hbm [shape: f32[8,1,32], index: 4, kind: output, shape index: {}]
  %s5 = sld [smem:[#allocation0]]
  $region49: #{_lambda_.1} parent=0
    _
  %s7 = ssub.s32 1, %s5
  %s8 = scalar_select 0, %s7, %s5
  %s9 = sshll.u32 %s0, 4
  %s10 = int_to_ptr.vmem [resolvable:$true] %s9
  %12 = dma.vmem_to_smem %s10, 16, [#allocation3], [#allocation2]
  %13 = dma.done [#allocation2], 16
  %14 = sfence
  $region1: #{_lambda_.1} parent=0
    #allocation4 [shape = 'u8[1024]{0}', space=vmem, size = 0x400, scoped, tag = 'output window, operand 0']
    #allocation5 [shape = 's32[2]{0}', space=sflag, size = 0x8, scoped, tag = 'scoped memory for _lambda_.1']
    %15 = vsyncpa [#allocation5], 0
    %s16 = scalar_lea.sflag [#allocation5], 1
    %17 = vsyncpa %s16, 0
    loop: start=0, step=1, limit=10
    $region2: #{_lambda_.1} parent=1 // loop_pre_header
      _
    $region3: #{_lambda_.1} parent=1 // loop_header
      %s19 = sphi 0, %s23
      %p20 = scmp.ge.s32.totalorder %s19, 10
      %s29 = sphi 0, %s31
      %s32 = sphi 0, %s29
      %s33 = sphi 0, %s32
      %s49 = sphi 0, %s33
      %s55 = sphi 0, %s57
      %s58 = sphi 0, %s55
      %s59 = sphi 0, %s58
      %s75 = sphi 0, %s59
      %s79 = sphi 0, %s79
      %s81 = sphi 0, %s79
      %s82 = sphi 0, %s81
      %s96 = sphi 0, %s82
      %s102 = sphi 0, %s104
      %s105 = sphi 0, %s102
      %s106 = sphi 0, %s105
      %s122 = sphi 0, %s106
    $region4: #{_lambda_.1} parent=1 // loop_header_branch
      %22 = sbr.rel (%p20) target = $region8
    $region5: #{_lambda_.1} parent=1 // loop_body
      %s24 = ssub.s32 %s19, 1
      %s25 = ssub.s32 %s19, 2
      %s26 = sadd.s32 %s19, 1
      %s27 = ssub.s32 %s19, %s26
      %p28 = scmp.eq.s32.totalorder %s27, 0
      %s30 = sadd.s32 %s29, 1
      %s31 = scalar_select %p28, %s29, %s30
      %p34 = pneg %p28
      %p35 = scmp.eq.s32.totalorder %s19, 7
      %p36 = por %p34, %p35
      %p37 = scmp.ne.s32.totalorder %s29, %s32
      %p38 = scmp.eq.s32.totalorder %s19, 0
      %p39 = por %p37, %p38
      %p40 = scmp.ne.s32.totalorder %s29, %s32
      %p41 = scmp.eq.s32.totalorder %s24, 7
      %p42 = por %p40, %p41
      %p43 = scmp.ne.s32.totalorder %s32, %s33
      %p44 = scmp.eq.s32.totalorder %s24, 0
      %p45 = por %p43, %p44
      %p46 = scmp.ne.s32.totalorder %s32, %s33
      %p47 = scmp.eq.s32.totalorder %s25, 7
      %p48 = por %p46, %p47
      %p50 = scmp.ne.s32.totalorder %s33, %s49
      %p51 = scmp.eq.s32.totalorder %s25, 0
      %p52 = por %p50, %p51
      %s53 = ssub.s32 %s19, %s26
      %p54 = scmp.eq.s32.totalorder %s53, 0
      %s56 = sadd.s32 %s55, 1
      %s57 = scalar_select %p54, %s55, %s56
      %p60 = pneg %p54
      %p61 = scmp.eq.s32.totalorder %s19, 7
      %p62 = por %p60, %p61
      %p63 = scmp.ne.s32.totalorder %s55, %s58
      %p64 = scmp.eq.s32.totalorder %s19, 0
      %p65 = por %p63, %p64
      %p66 = scmp.ne.s32.totalorder %s55, %s58
      %p67 = scmp.eq.s32.totalorder %s24, 7
      %p68 = por %p66, %p67
      %p69 = scmp.ne.s32.totalorder %s58, %s59
      %p70 = scmp.eq.s32.totalorder %s24, 0
      %p71 = por %p69, %p70
      %p72 = scmp.ne.s32.totalorder %s58, %s59
      %p73 = scmp.eq.s32.totalorder %s25, 7
      %p74 = por %p72, %p73
      %p76 = scmp.ne.s32.totalorder %s59, %s75
      %p77 = scmp.eq.s32.totalorder %s25, 0
      %p78 = por %p76, %p77
      %s80 = sadd.s32 %s79, 1
      %p83 = scmp.eq.s32.totalorder %s19, 7
      %p84 = scmp.ne.s32.totalorder %s79, %s81
      %p85 = scmp.eq.s32.totalorder %s19, 0
      %p86 = por %p84, %p85
      %p87 = scmp.ne.s32.totalorder %s79, %s81
      %p88 = scmp.eq.s32.totalorder %s24, 7
      %p89 = por %p87, %p88
      %p90 = scmp.ne.s32.totalorder %s81, %s82
      %p91 = scmp.eq.s32.totalorder %s24, 0
      %p92 = por %p90, %p91
      %p93 = scmp.ne.s32.totalorder %s81, %s82
      %p94 = scmp.eq.s32.totalorder %s25, 7
      %p95 = por %p93, %p94
      %p97 = scmp.ne.s32.totalorder %s82, %s96
      %p98 = scmp.eq.s32.totalorder %s25, 0
      %p99 = por %p97, %p98
      %s100 = ssub.s32 %s19, %s26
      %p101 = scmp.eq.s32.totalorder %s100, 0
      %s103 = sadd.s32 %s102, 1
      %s104 = scalar_select %p101, %s102, %s103
      %p107 = pneg %p101
      %p108 = scmp.eq.s32.totalorder %s19, 7
      %p109 = por %p107, %p108
      %p110 = scmp.ne.s32.totalorder %s102, %s105
      %p111 = scmp.eq.s32.totalorder %s19, 0
      %p112 = por %p110, %p111
      %p113 = scmp.ne.s32.totalorder %s102, %s105
      %p114 = scmp.eq.s32.totalorder %s24, 7
      %p115 = por %p113, %p114
      %p116 = scmp.ne.s32.totalorder %s105, %s106
      %p117 = scmp.eq.s32.totalorder %s24, 0
      %p118 = por %p116, %p117
      %p119 = scmp.ne.s32.totalorder %s105, %s106
      %p120 = scmp.eq.s32.totalorder %s25, 7
      %p121 = por %p119, %p120
      %p123 = scmp.ne.s32.totalorder %s106, %s122
      %p124 = scmp.eq.s32.totalorder %s25, 0
      %p125 = por %p123, %p124
      %p126 = scmp.le.s32.totalorder 1, %s19
      %p127 = scmp.lt.s32.totalorder %s19, 9
      %p128 = pnand %p126, %p127
      %p129 = pneg %p128
      // Predicated region
      $region9: #{_lambda_.1} parent=5 // pred_check
        _
      $region10: #{_lambda_.1} parent=5 // pred_check_branch
        %131 = sbr.rel (%p128) target = $region12
      $region11: #{_lambda_.1} parent=5 // pred_region
        %s132 = ssub.s32 %s19, 1
        // Predicated region
        $region13: #{_lambda_.1} parent=11 // pred_check
          %p133 = pneg %p92
        $region14: #{_lambda_.1} parent=11 // pred_check_branch
          %135 = sbr.rel (%p133) target = $region16
        $region15: #{_lambda_.1} parent=11 // pred_region
          _
        $region16: #{_lambda_.1} parent=11 // pred_fallthru
          _
      $region12: #{_lambda_.1} parent=5 // pred_fallthru
        _
      %p136 = scmp.lt.s32.totalorder %s19, 8
      // Predicated region
      $region17: #{_lambda_.1} parent=5 // pred_check
        %p137 = pneg %p136
      $region18: #{_lambda_.1} parent=5 // pred_check_branch
        %139 = sbr.rel (%p137) target = $region20
      $region19: #{_lambda_.1} parent=5 // pred_region
        // Predicated region
        $region21: #{_lambda_.1} parent=19 // pred_check
          %p140 = pneg %p39
        $region22: #{_lambda_.1} parent=19 // pred_check_branch
          %142 = sbr.rel (%p140) target = $region24
        $region23: #{_lambda_.1} parent=19 // pred_region
          %p143 = scmp.lt.s32.totalorder %s19, 7
          %s144 = scalar_select %p143, %s19, 7
          %s145 = smul.addr %s144, 8
          %s146 = smul.addr %s145, 8
          %s147 = scalar_lea.vmem %s1, %s146
        $region24: #{_lambda_.1} parent=19 // pred_fallthru
          _
        // Predicated region
        $region25: #{_lambda_.1} parent=19 // pred_check
          %p148 = pneg %p65
        $region26: #{_lambda_.1} parent=19 // pred_check_branch
          %150 = sbr.rel (%p148) target = $region28
        $region27: #{_lambda_.1} parent=19 // pred_region
          %p151 = scmp.lt.s32.totalorder %s19, 7
          %s152 = scalar_select %p151, %s19, 7
          %s153 = scalar_lea.vmem %s2, %s152
        $region28: #{_lambda_.1} parent=19 // pred_fallthru
          _
      $region20: #{_lambda_.1} parent=5 // pred_fallthru
        _
      %p154 = scmp.le.s32.totalorder 1, %s19
      %p155 = scmp.lt.s32.totalorder %s19, 9
      %p156 = pnand %p154, %p155
      %p157 = pneg %p156
      // Predicated region
      $region29: #{_lambda_.1} parent=5 // pred_check
        _
      $region30: #{_lambda_.1} parent=5 // pred_check_branch
        %159 = sbr.rel (%p156) target = $region32
      $region31: #{_lambda_.1} parent=5 // pred_region
        %s160 = ssub.s32 %s19, 1
        %p161 = scmp.lt.s32.totalorder %s24, 7
        %s162 = scalar_select %p161, %s24, 7
        %s163 = smul.addr %s162, 8
        %s164 = smul.addr %s163, 8
        %s165 = scalar_lea.vmem %s1, %s164
        %p166 = pneg %p45
        %p167 = pneg %p42
        %p168 = scmp.lt.s32.totalorder %s24, 7
        %s169 = scalar_select %p168, %s24, 7
        %s170 = scalar_lea.vmem %s2, %s169
        %p171 = pneg %p71
        %p172 = pneg %p68
        %p173 = pneg %p92
        %p174 = pneg %p89
        %p175 = pneg %p118
        %p176 = pneg %p115
        %s177 = sand.u32 %s105, 1
        %s178 = scalar_lea.sflag [#allocation5], %s177
        %s179 = sand.u32 %s105, 1
        %s180 = scalar_lea.vmem [#allocation4], %s179
        %p181 = scmp.lt.s32.totalorder %s24, 7
        %s182 = scalar_select %p181, %s24, 7
        %s183 = smul.addr %s182, 8
        %s184 = smul.addr %s183, 8
        %s185 = scalar_lea.vmem %s1, %s184
        %p186 = scmp.lt.s32.totalorder %s24, 7
        %s187 = scalar_select %p186, %s24, 7
        %s188 = scalar_lea.vmem %s2, %s187
        %s189 = sld [smem:[#allocation3 + %s24]]
        %p190 = scmp.gt.s32.totalorder %s189, 0
        // Predicated region
        $region33: #{_lambda_.1} parent=31 // pred_check
          %p191 = pneg %p190
        $region34: #{_lambda_.1} parent=31 // pred_check_branch
          %193 = sbr.rel (%p191) target = $region36
        $region35: #{_lambda_.1} parent=31 // pred_region
          %v194 = vld [vmem:[%s185] sm:$0xff]
          %v195 = vld [vmem:[%s185 + $0x8] sm:$0xff]
          %v196 = vld [vmem:[%s185 + $0x10] sm:$0xff]
          %v197 = vld [vmem:[%s185 + $0x18] sm:$0xff]
          %v198 = vld [vmem:[%s185 + $0x20] sm:$0xff]
          %v199 = vld [vmem:[%s185 + $0x28] sm:$0xff]
          %v200 = vld [vmem:[%s185 + $0x30] sm:$0xff]
          %v201 = vld [vmem:[%s185 + $0x38] sm:$0xff]
          %v202 = vlaneseq
          %v203 = vand.u32 %v202, 127
          %204 = vset.pattern.permute.xlu0 0
          %205 = vperm.xlu0 %204, %v194
          %v206 = vpop.permute.xlu0 %205
          %207 = vset.pattern.permute.xlu0 0
          %208 = vperm.xlu0 %207, %v195
          %v209 = vpop.permute.xlu0 %208
          %210 = vset.pattern.permute.xlu0 0
          %211 = vperm.xlu0 %210, %v196
          %v212 = vpop.permute.xlu0 %211
          %213 = vset.pattern.permute.xlu0 0
          %214 = vperm.xlu0 %213, %v197
          %v215 = vpop.permute.xlu0 %214
          %216 = vset.pattern.permute.xlu0 0
          %217 = vperm.xlu0 %216, %v198
          %v218 = vpop.permute.xlu0 %217
          %219 = vset.pattern.permute.xlu0 0
          %220 = vperm.xlu0 %219, %v199
          %v221 = vpop.permute.xlu0 %220
          %222 = vset.pattern.permute.xlu0 0
          %223 = vperm.xlu0 %222, %v200
          %v224 = vpop.permute.xlu0 %223
          %225 = vset.pattern.permute.xlu0 0
          %226 = vperm.xlu0 %225, %v201
          %v227 = vpop.permute.xlu0 %226
          %vm228 = vcmp.eq.s32.totalorder %v203, %v206
          %vm229 = vcmp.eq.s32.totalorder %v203, %v209
          %vm230 = vcmp.eq.s32.totalorder %v203, %v212
          %vm231 = vcmp.eq.s32.totalorder %v203, %v215
          %vm232 = vcmp.eq.s32.totalorder %v203, %v218
          %vm233 = vcmp.eq.s32.totalorder %v203, %v221
          %vm234 = vcmp.eq.s32.totalorder %v203, %v224
          %vm235 = vcmp.eq.s32.totalorder %v203, %v227
          %v236 = vsel %vm228, 1, 0
          %v237 = vsel %vm229, 1, 0
          %v238 = vsel %vm230, 1, 0
          %v239 = vsel %vm231, 1, 0
          %v240 = vsel %vm232, 1, 0
          %v241 = vsel %vm233, 1, 0
          %v242 = vsel %vm234, 1, 0
          %v243 = vsel %vm235, 1, 0
          %v244 = vcvt.s32.f32 %v236
          %v245 = vcvt.s32.f32 %v237
          %v246 = vcvt.s32.f32 %v238
          %v247 = vcvt.s32.f32 %v239
          %v248 = vcvt.s32.f32 %v240
          %v249 = vcvt.s32.f32 %v241
          %v250 = vcvt.s32.f32 %v242
          %v251 = vcvt.s32.f32 %v243
          %v252 = vld [vmem:[%s3] sm:$0xff]
          %v253 = vld [vmem:[%s3 + $0x8] sm:$0xff]
          %v254 = vld [vmem:[%s3 + $0x10] sm:$0xff]
          %v255 = vld [vmem:[%s3 + $0x18] sm:$0xff]
          %vm256 = vcmask 261120
          %v258 = vsel %vm256, %v244, 0
          %v261 = vsel %vm256, %v245, 0
          %v264 = vsel %vm256, %v246, 0
          %v267 = vsel %vm256, %v247, 0
          %v270 = vsel %vm256, %v248, 0
          %v273 = vsel %vm256, %v249, 0
          %v276 = vsel %vm256, %v250, 0
          %v279 = vsel %vm256, %v251, 0
          %281 = vmatprep.subr.mxu0 0.0
          %282 = vmatpush1.msra.mxu0 0.0
          %283 = vmatprep.subr.mxu0 0.0
          %284 = vmatpush1.msra.mxu0 0.0
          %285 = vmatprep.subr.mxu0 0.0
          %286 = vmatpush1.msra.mxu0 0.0
          %287 = vmatprep.subr.mxu0 0.0
          %288 = vmatpush1.msra.mxu0 0.0
          %289 = vmatprep.subr.mxu0 0.0
          %290 = vmatpush1.msra.mxu0 0.0
          %291 = vmatprep.subr.mxu0 0.0
          %292 = vmatpush1.msra.mxu0 0.0
          %293 = vmatprep.subr.mxu0 0.0
          %294 = vmatpush1.msra.mxu0 0.0
          %295 = vmatprep.subr.mxu0 0.0
          %296 = vmatpush1.msra.mxu0 0.0
          %297 = vmatprep.subr.mxu0 0.0
          %298 = vmatpush1.msra.mxu0 0.0
          %299 = vmatprep.subr.mxu0 0.0
          %300 = vmatpush1.msra.mxu0 0.0
          %301 = vmatprep.subr.mxu0 0.0
          %302 = vmatpush1.msra.mxu0 0.0
          %303 = vmatprep.subr.mxu0 0.0
          %304 = vmatpush1.msra.mxu0 0.0
          %305 = vmatprep.subr.mxu0 0.0
          %306 = vmatpush1.msra.mxu0 %v255
          %307 = vmatprep.subr.mxu0 0.0
          %308 = vmatpush1.msra.mxu0 %v254
          %309 = vmatprep.subr.mxu0 0.0
          %310 = vmatpush1.msra.mxu0 %v253
          %311 = vmatprep.subr.mxu0 0.0
          %312 = vmatpush1.msra.mxu0 %v252
          %313 = vmatprep.subr.mxu0 0.0
          %314 = vmatpush2.msra.mxu0 0.0
          %315 = vmatprep.subr.mxu0 0.0
          %316 = vmatpush2.msra.mxu0 0.0
          %317 = vmatprep.subr.mxu0 0.0
          %318 = vmatpush2.msra.mxu0 0.0
          %319 = vmatprep.subr.mxu0 0.0
          %320 = vmatpush2.msra.mxu0 0.0
          %321 = vmatprep.subr.mxu0 0.0
          %322 = vmatpush2.msra.mxu0 0.0
          %323 = vmatprep.subr.mxu0 0.0
          %324 = vmatpush2.msra.mxu0 0.0
          %325 = vmatprep.subr.mxu0 0.0
          %326 = vmatpush2.msra.mxu0 0.0
          %327 = vmatprep.subr.mxu0 0.0
          %328 = vmatpush2.msra.mxu0 0.0
          %329 = vmatprep.subr.mxu0 0.0
          %330 = vmatpush2.msra.mxu0 0.0
          %331 = vmatprep.subr.mxu0 0.0
          %332 = vmatpush2.msra.mxu0 0.0
          %333 = vmatprep.subr.mxu0 0.0
          %334 = vmatpush2.msra.mxu0 0.0
          %335 = vmatprep.subr.mxu0 0.0
          %336 = vmatpush2.msra.mxu0 0.0
          %337 = vmatprep.subr.mxu0 0.0
          %338 = vmatpush2.msra.mxu0 0.0
          %339 = vmatprep.subr.mxu0 0.0
          %340 = vmatpush2.msra.mxu0 0.0
          %341 = vmatprep.subr.mxu0 0.0
          %342 = vmatpush2.msra.mxu0 0.0
          %343 = vmatprep.subr.mxu0 0.0
          %344 = vmatpush2.msra.mxu0 0.0
          %345 = vmatprep.mubr.f32.mxu0 0.0
          %346 = vmatmul.mubr.f32.gmra.mxu0 %v258
          %v347 = vpop.f32.mrf.mxu0
          %v348 = vadd.f32 0.0, %v347
          %v349 = vpop.f32.mrf.mxu0
          %350 = vmatprep.mubr.f32.mxu0 0.0
          %351 = vmatmul.mubr.f32.gmra.mxu0 %v261
          %v352 = vpop.f32.mrf.mxu0
          %v353 = vadd.f32 0.0, %v352
          %v354 = vpop.f32.mrf.mxu0
          %355 = vmatprep.mubr.f32.mxu0 0.0
          %356 = vmatmul.mubr.f32.gmra.mxu0 %v264
          %v357 = vpop.f32.mrf.mxu0
          %v358 = vadd.f32 0.0, %v357
          %v359 = vpop.f32.mrf.mxu0
          %360 = vmatprep.mubr.f32.mxu0 0.0
          %361 = vmatmul.mubr.f32.gmra.mxu0 %v267
          %v362 = vpop.f32.mrf.mxu0
          %v363 = vadd.f32 0.0, %v362
          %v364 = vpop.f32.mrf.mxu0
          %365 = vmatprep.mubr.f32.mxu0 0.0
          %366 = vmatmul.mubr.f32.gmra.mxu0 %v270
          %v367 = vpop.f32.mrf.mxu0
          %v368 = vadd.f32 0.0, %v367
          %v369 = vpop.f32.mrf.mxu0
          %370 = vmatprep.mubr.f32.mxu0 0.0
          %371 = vmatmul.mubr.f32.gmra.mxu0 %v273
          %v372 = vpop.f32.mrf.mxu0
          %v373 = vadd.f32 0.0, %v372
          %v374 = vpop.f32.mrf.mxu0
          %375 = vmatprep.mubr.f32.mxu0 0.0
          %376 = vmatmul.mubr.f32.gmra.mxu0 %v276
          %v377 = vpop.f32.mrf.mxu0
          %v378 = vadd.f32 0.0, %v377
          %v379 = vpop.f32.mrf.mxu0
          %380 = vmatprep.mubr.f32.mxu0 0.0
          %381 = vmatmul.mubr.f32.gmra.mxu0 %v279
          %v382 = vpop.f32.mrf.mxu0
          %v383 = vadd.f32 0.0, %v382
          %v384 = vpop.f32.mrf.mxu0
          %385 = vdwg.mxu0
          %v386 = vlaneseq
          %v387 = vshrl.u32 %v386, 7
          %v388 = vadd.s32 %v387, 8
          %v389 = vadd.s32 %v387, 16
          %v390 = vadd.s32 %v387, 24
          %v391 = vadd.s32 %v387, 32
          %v392 = vadd.s32 %v387, 40
          %v393 = vadd.s32 %v387, 48
          %v394 = vadd.s32 %v387, 56
          %s395 = ssub.s32 %s189, 1
          %v396 = vstv %s395
          %vm397 = vcmp.eq.s32.totalorder %v387, %v396
          %vm398 = vcmp.eq.s32.totalorder %v388, %v396
          %vm399 = vcmp.eq.s32.totalorder %v389, %v396
          %vm400 = vcmp.eq.s32.totalorder %v390, %v396
          %vm401 = vcmp.eq.s32.totalorder %v391, %v396
          %vm402 = vcmp.eq.s32.totalorder %v392, %v396
          %vm403 = vcmp.eq.s32.totalorder %v393, %v396
          %vm404 = vcmp.eq.s32.totalorder %v394, %v396
          %v405 = vsel %vm397, 1, 0
          %v406 = vsel %vm398, 1, 0
          %v407 = vsel %vm399, 1, 0
          %v408 = vsel %vm400, 1, 0
          %v409 = vsel %vm401, 1, 0
          %v410 = vsel %vm402, 1, 0
          %v411 = vsel %vm403, 1, 0
          %v412 = vsel %vm404, 1, 0
          %v413 = vcvt.s32.f32 %v405
          %v414 = vcvt.s32.f32 %v406
          %v415 = vcvt.s32.f32 %v407
          %v416 = vcvt.s32.f32 %v408
          %v417 = vcvt.s32.f32 %v409
          %v418 = vcvt.s32.f32 %v410
          %v419 = vcvt.s32.f32 %v411
          %v420 = vcvt.s32.f32 %v412
          %v421 = vmul.f32 %v413, %v348
          %v422 = vmul.f32 %v414, %v353
          %v423 = vmul.f32 %v415, %v358
          %v424 = vmul.f32 %v416, %v363
          %v425 = vmul.f32 %v417, %v368
          %v426 = vmul.f32 %v418, %v373
          %v427 = vmul.f32 %v419, %v378
          %v428 = vmul.f32 %v420, %v383
          %v429 = vsel %vm256, %v421, 0.0
          %v430 = vsel %vm256, %v422, 0.0
          %v431 = vadd.f32 %v429, %v430
          %v432 = vsel %vm256, %v423, 0.0
          %v433 = vadd.f32 %v431, %v432
          %v434 = vsel %vm256, %v424, 0.0
          %v435 = vadd.f32 %v433, %v434
          %v436 = vsel %vm256, %v425, 0.0
          %v437 = vadd.f32 %v435, %v436
          %v438 = vsel %vm256, %v426, 0.0
          %v439 = vadd.f32 %v437, %v438
          %v440 = vsel %vm256, %v427, 0.0
          %v441 = vadd.f32 %v439, %v440
          %v442 = vsel %vm256, %v428, 0.0
          %v443 = vadd.f32 %v441, %v442
          %v444 = vrot.slane %v443, 4
          %v445 = vadd.f32 %v443, %v444
          %v446 = vrot.slane %v445, 2
          %v447 = vadd.f32 %v445, %v446
          %v448 = vrot.slane %v447, 1
          %v449 = vadd.f32 %v447, %v448
          %v450 = vld [vmem:[%s3 + $0x40] sm:$0xff]
          %v451 = vld [vmem:[%s3 + $0x48] sm:$0xff]
          %v452 = vld [vmem:[%s3 + $0x50] sm:$0xff]
          %v453 = vld [vmem:[%s3 + $0x58] sm:$0xff]
          %v455 = vsel %vm256, %v348, 0
          %v458 = vsel %vm256, %v353, 0
          %v461 = vsel %vm256, %v358, 0
          %v464 = vsel %vm256, %v363, 0
          %v467 = vsel %vm256, %v368, 0
          %v470 = vsel %vm256, %v373, 0
          %v473 = vsel %vm256, %v378, 0
          %v476 = vsel %vm256, %v383, 0
          %478 = vmatprep.subr.mxu0 0.0
          %479 = vmatpush1.msra.mxu0 0.0
          %480 = vmatprep.subr.mxu0 0.0
          %481 = vmatpush1.msra.mxu0 0.0
          %482 = vmatprep.subr.mxu0 0.0
          %483 = vmatpush1.msra.mxu0 0.0
          %484 = vmatprep.subr.mxu0 0.0
          %485 = vmatpush1.msra.mxu0 0.0
          %486 = vmatprep.subr.mxu0 0.0
          %487 = vmatpush1.msra.mxu0 0.0
          %488 = vmatprep.subr.mxu0 0.0
          %489 = vmatpush1.msra.mxu0 0.0
          %490 = vmatprep.subr.mxu0 0.0
          %491 = vmatpush1.msra.mxu0 0.0
          %492 = vmatprep.subr.mxu0 0.0
          %493 = vmatpush1.msra.mxu0 0.0
          %494 = vmatprep.subr.mxu0 0.0
          %495 = vmatpush1.msra.mxu0 0.0
          %496 = vmatprep.subr.mxu0 0.0
          %497 = vmatpush1.msra.mxu0 0.0
          %498 = vmatprep.subr.mxu0 0.0
          %499 = vmatpush1.msra.mxu0 0.0
          %500 = vmatprep.subr.mxu0 0.0
          %501 = vmatpush1.msra.mxu0 0.0
          %502 = vmatprep.subr.mxu0 0.0
          %503 = vmatpush1.msra.mxu0 %v453
          %504 = vmatprep.subr.mxu0 0.0
          %505 = vmatpush1.msra.mxu0 %v452
          %506 = vmatprep.subr.mxu0 0.0
          %507 = vmatpush1.msra.mxu0 %v451
          %508 = vmatprep.subr.mxu0 0.0
          %509 = vmatpush1.msra.mxu0 %v450
          %510 = vmatprep.subr.mxu0 0.0
          %511 = vmatpush2.msra.mxu0 0.0
          %512 = vmatprep.subr.mxu0 0.0
          %513 = vmatpush2.msra.mxu0 0.0
          %514 = vmatprep.subr.mxu0 0.0
          %515 = vmatpush2.msra.mxu0 0.0
          %516 = vmatprep.subr.mxu0 0.0
          %517 = vmatpush2.msra.mxu0 0.0
          %518 = vmatprep.subr.mxu0 0.0
          %519 = vmatpush2.msra.mxu0 0.0
          %520 = vmatprep.subr.mxu0 0.0
          %521 = vmatpush2.msra.mxu0 0.0
          %522 = vmatprep.subr.mxu0 0.0
          %523 = vmatpush2.msra.mxu0 0.0
          %524 = vmatprep.subr.mxu0 0.0
          %525 = vmatpush2.msra.mxu0 0.0
          %526 = vmatprep.subr.mxu0 0.0
          %527 = vmatpush2.msra.mxu0 0.0
          %528 = vmatprep.subr.mxu0 0.0
          %529 = vmatpush2.msra.mxu0 0.0
          %530 = vmatprep.subr.mxu0 0.0
          %531 = vmatpush2.msra.mxu0 0.0
          %532 = vmatprep.subr.mxu0 0.0
          %533 = vmatpush2.msra.mxu0 0.0
          %534 = vmatprep.subr.mxu0 0.0
          %535 = vmatpush2.msra.mxu0 0.0
          %536 = vmatprep.subr.mxu0 0.0
          %537 = vmatpush2.msra.mxu0 0.0
          %538 = vmatprep.subr.mxu0 0.0
          %539 = vmatpush2.msra.mxu0 0.0
          %540 = vmatprep.subr.mxu0 0.0
          %541 = vmatpush2.msra.mxu0 0.0
          %542 = vmatprep.mubr.f32.mxu0 0.0
          %543 = vmatmul.mubr.f32.gmra.mxu0 %v455
          %v544 = vpop.f32.mrf.mxu0
          %v545 = vadd.f32 0.0, %v544
          %v546 = vpop.f32.mrf.mxu0
          %547 = vmatprep.mubr.f32.mxu0 0.0
          %548 = vmatmul.mubr.f32.gmra.mxu0 %v458
          %v549 = vpop.f32.mrf.mxu0
          %v550 = vadd.f32 0.0, %v549
          %v551 = vpop.f32.mrf.mxu0
          %552 = vmatprep.mubr.f32.mxu0 0.0
          %553 = vmatmul.mubr.f32.gmra.mxu0 %v461
          %v554 = vpop.f32.mrf.mxu0
          %v555 = vadd.f32 0.0, %v554
          %v556 = vpop.f32.mrf.mxu0
          %557 = vmatprep.mubr.f32.mxu0 0.0
          %558 = vmatmul.mubr.f32.gmra.mxu0 %v464
          %v559 = vpop.f32.mrf.mxu0
          %v560 = vadd.f32 0.0, %v559
          %v561 = vpop.f32.mrf.mxu0
          %562 = vmatprep.mubr.f32.mxu0 0.0
          %563 = vmatmul.mubr.f32.gmra.mxu0 %v467
          %v564 = vpop.f32.mrf.mxu0
          %v565 = vadd.f32 0.0, %v564
          %v566 = vpop.f32.mrf.mxu0
          %567 = vmatprep.mubr.f32.mxu0 0.0
          %568 = vmatmul.mubr.f32.gmra.mxu0 %v470
          %v569 = vpop.f32.mrf.mxu0
          %v570 = vadd.f32 0.0, %v569
          %v571 = vpop.f32.mrf.mxu0
          %572 = vmatprep.mubr.f32.mxu0 0.0
          %573 = vmatmul.mubr.f32.gmra.mxu0 %v473
          %v574 = vpop.f32.mrf.mxu0
          %v575 = vadd.f32 0.0, %v574
          %v576 = vpop.f32.mrf.mxu0
          %577 = vmatprep.mubr.f32.mxu0 0.0
          %578 = vmatmul.mubr.f32.gmra.mxu0 %v476
          %v579 = vpop.f32.mrf.mxu0
          %v580 = vadd.f32 0.0, %v579
          %v581 = vpop.f32.mrf.mxu0
          %582 = vdwg.mxu0
          %v583 = vld [vmem:[%s3 + $0x20] sm:$0xff]
          %v584 = vld [vmem:[%s3 + $0x28] sm:$0xff]
          %v585 = vld [vmem:[%s3 + $0x30] sm:$0xff]
          %v586 = vld [vmem:[%s3 + $0x38] sm:$0xff]
          %v588 = vsel %vm256, %v449, 0
          %590 = vmatprep.subr.mxu0 0.0
          %591 = vmatpush1.msra.mxu0 0.0
          %592 = vmatprep.subr.mxu0 0.0
          %593 = vmatpush1.msra.mxu0 0.0
          %594 = vmatprep.subr.mxu0 0.0
          %595 = vmatpush1.msra.mxu0 0.0
          %596 = vmatprep.subr.mxu0 0.0
          %597 = vmatpush1.msra.mxu0 0.0
          %598 = vmatprep.subr.mxu0 0.0
          %599 = vmatpush1.msra.mxu0 0.0
          %600 = vmatprep.subr.mxu0 0.0
          %601 = vmatpush1.msra.mxu0 0.0
          %602 = vmatprep.subr.mxu0 0.0
          %603 = vmatpush1.msra.mxu0 0.0
          %604 = vmatprep.subr.mxu0 0.0
          %605 = vmatpush1.msra.mxu0 0.0
          %606 = vmatprep.subr.mxu0 0.0
          %607 = vmatpush1.msra.mxu0 0.0
          %608 = vmatprep.subr.mxu0 0.0
          %609 = vmatpush1.msra.mxu0 0.0
          %610 = vmatprep.subr.mxu0 0.0
          %611 = vmatpush1.msra.mxu0 0.0
          %612 = vmatprep.subr.mxu0 0.0
          %613 = vmatpush1.msra.mxu0 0.0
          %614 = vmatprep.subr.mxu0 0.0
          %615 = vmatpush1.msra.mxu0 %v586
          %616 = vmatprep.subr.mxu0 0.0
          %617 = vmatpush1.msra.mxu0 %v585
          %618 = vmatprep.subr.mxu0 0.0
          %619 = vmatpush1.msra.mxu0 %v584
          %620 = vmatprep.subr.mxu0 0.0
          %621 = vmatpush1.msra.mxu0 %v583
          %622 = vmatprep.subr.mxu0 0.0
          %623 = vmatpush2.msra.mxu0 0.0
          %624 = vmatprep.subr.mxu0 0.0
          %625 = vmatpush2.msra.mxu0 0.0
          %626 = vmatprep.subr.mxu0 0.0
          %627 = vmatpush2.msra.mxu0 0.0
          %628 = vmatprep.subr.mxu0 0.0
          %629 = vmatpush2.msra.mxu0 0.0
          %630 = vmatprep.subr.mxu0 0.0
          %631 = vmatpush2.msra.mxu0 0.0
          %632 = vmatprep.subr.mxu0 0.0
          %633 = vmatpush2.msra.mxu0 0.0
          %634 = vmatprep.subr.mxu0 0.0
          %635 = vmatpush2.msra.mxu0 0.0
          %636 = vmatprep.subr.mxu0 0.0
          %637 = vmatpush2.msra.mxu0 0.0
          %638 = vmatprep.subr.mxu0 0.0
          %639 = vmatpush2.msra.mxu0 0.0
          %640 = vmatprep.subr.mxu0 0.0
          %641 = vmatpush2.msra.mxu0 0.0
          %642 = vmatprep.subr.mxu0 0.0
          %643 = vmatpush2.msra.mxu0 0.0
          %644 = vmatprep.subr.mxu0 0.0
          %645 = vmatpush2.msra.mxu0 0.0
          %646 = vmatprep.subr.mxu0 0.0
          %647 = vmatpush2.msra.mxu0 0.0
          %648 = vmatprep.subr.mxu0 0.0
          %649 = vmatpush2.msra.mxu0 0.0
          %650 = vmatprep.subr.mxu0 0.0
          %651 = vmatpush2.msra.mxu0 0.0
          %652 = vmatprep.subr.mxu0 0.0
          %653 = vmatpush2.msra.mxu0 0.0
          %654 = vmatprep.mubr.f32.mxu0 0.0
          %655 = vmatmul.mubr.f32.gmra.mxu0 %v588
          %v656 = vpop.f32.mrf.mxu0
          %v657 = vadd.f32 0.0, %v656
          %v658 = vpop.f32.mrf.mxu0
          %659 = vdwg.mxu0
          %v660 = vlaneseq
          %v661 = vshrl.u32 %v660, 7
          %v662 = vsub.s32 0, %v661
          %v663 = vrot.slane %v657, %v662
          %v664 = vmul.f32 %v545, %v663
          %v665 = vmul.f32 %v550, %v663
          %v666 = vmul.f32 %v555, %v663
          %v667 = vmul.f32 %v560, %v663
          %v668 = vmul.f32 %v565, %v663
          %v669 = vmul.f32 %v570, %v663
          %v670 = vmul.f32 %v575, %v663
          %v671 = vmul.f32 %v580, %v663
          %v672 = vsel %vm256, %v664, 0.0
          %673 = vadd.xlane.f32.xlu0 %v672
          %v674 = vpop.xlane.xlu0 %673
          %v675 = vsel %vm256, %v665, 0.0
          %676 = vadd.xlane.f32.xlu0 %v675
          %v677 = vpop.xlane.xlu0 %676
          %v678 = vsel %vm256, %v666, 0.0
          %679 = vadd.xlane.f32.xlu0 %v678
          %v680 = vpop.xlane.xlu0 %679
          %v681 = vsel %vm256, %v667, 0.0
          %682 = vadd.xlane.f32.xlu0 %v681
          %v683 = vpop.xlane.xlu0 %682
          %v684 = vsel %vm256, %v668, 0.0
          %685 = vadd.xlane.f32.xlu0 %v684
          %v686 = vpop.xlane.xlu0 %685
          %v687 = vsel %vm256, %v669, 0.0
          %688 = vadd.xlane.f32.xlu0 %v687
          %v689 = vpop.xlane.xlu0 %688
          %v690 = vsel %vm256, %v670, 0.0
          %691 = vadd.xlane.f32.xlu0 %v690
          %v692 = vpop.xlane.xlu0 %691
          %v693 = vsel %vm256, %v671, 0.0
          %694 = vadd.xlane.f32.xlu0 %v693
          %v695 = vpop.xlane.xlu0 %694
          %v696 = vmul.f32 %v674, 0.17677669
          %v697 = vmul.f32 %v677, 0.17677669
          %v698 = vmul.f32 %v680, 0.17677669
          %v699 = vmul.f32 %v683, 0.17677669
          %v700 = vmul.f32 %v686, 0.17677669
          %v701 = vmul.f32 %v689, 0.17677669
          %v702 = vmul.f32 %v692, 0.17677669
          %v703 = vmul.f32 %v695, 0.17677669
          %v704 = vstv %s189
          %vm705 = vcmp.lt.s32.totalorder %v387, %v704
          %vm706 = vcmp.lt.s32.totalorder %v388, %v704
          %vm707 = vcmp.lt.s32.totalorder %v389, %v704
          %vm708 = vcmp.lt.s32.totalorder %v390, %v704
          %vm709 = vcmp.lt.s32.totalorder %v391, %v704
          %vm710 = vcmp.lt.s32.totalorder %v392, %v704
          %vm711 = vcmp.lt.s32.totalorder %v393, %v704
          %vm712 = vcmp.lt.s32.totalorder %v394, %v704
          %v713 = vsel %vm705, %v696, -1e+30
          %v714 = vsel %vm706, %v697, -1e+30
          %v715 = vsel %vm707, %v698, -1e+30
          %v716 = vsel %vm708, %v699, -1e+30
          %v717 = vsel %vm709, %v700, -1e+30
          %v718 = vsel %vm710, %v701, -1e+30
          %v719 = vsel %vm711, %v702, -1e+30
          %v720 = vsel %vm712, %v703, -1e+30
          %v721 = vmax.f32 %v713, %v717
          %v722 = vmax.f32 %v714, %v718
          %v723 = vmax.f32 %v715, %v719
          %v724 = vmax.f32 %v716, %v720
          %v725 = vmax.f32 %v721, %v722
          %v726 = vmax.f32 %v723, %v724
          %v727 = vmax.f32 %v725, %v726
          %v728 = vrot.slane %v727, 4
          %v729 = vmax.f32 %v727, %v728
          %v730 = vrot.slane %v729, 2
          %v731 = vmax.f32 %v729, %v730
          %v732 = vrot.slane %v731, 1
          %v733 = vmax.f32 %v731, %v732
          %v734 = vsub.f32 %v713, %v733
          %v735 = vsub.f32 %v714, %v733
          %v736 = vsub.f32 %v715, %v733
          %v737 = vsub.f32 %v716, %v733
          %v738 = vsub.f32 %v717, %v733
          %v739 = vsub.f32 %v718, %v733
          %v740 = vsub.f32 %v719, %v733
          %v741 = vsub.f32 %v720, %v733
          %v742 = vmul.f32 %v734, 1.442695
          %v743 = vpow.pop %v742
          %v744 = vmul.f32 %v735, 1.442695
          %v745 = vpow.pop %v744
          %v746 = vmul.f32 %v736, 1.442695
          %v747 = vpow.pop %v746
          %v748 = vmul.f32 %v737, 1.442695
          %v749 = vpow.pop %v748
          %v750 = vmul.f32 %v738, 1.442695
          %v751 = vpow.pop %v750
          %v752 = vmul.f32 %v739, 1.442695
          %v753 = vpow.pop %v752
          %v754 = vmul.f32 %v740, 1.442695
          %v755 = vpow.pop %v754
          %v756 = vmul.f32 %v741, 1.442695
          %v757 = vpow.pop %v756
          %v758 = vadd.f32 %v743, %v745
          %v759 = vadd.f32 %v758, %v747
          %v760 = vadd.f32 %v759, %v749
          %v761 = vadd.f32 %v760, %v751
          %v762 = vadd.f32 %v761, %v753
          %v763 = vadd.f32 %v762, %v755
          %v764 = vadd.f32 %v763, %v757
          %v765 = vrot.slane %v764, 4
          %v766 = vadd.f32 %v764, %v765
          %v767 = vrot.slane %v766, 2
          %v768 = vadd.f32 %v766, %v767
          %v769 = vrot.slane %v768, 1
          %v770 = vadd.f32 %v768, %v769
          %v771 = vrcp.pop %v770
          %v772 = vmul.f32 %v743, %v545
          %v773 = vmul.f32 %v745, %v550
          %v774 = vmul.f32 %v747, %v555
          %v775 = vmul.f32 %v749, %v560
          %v776 = vmul.f32 %v751, %v565
          %v777 = vmul.f32 %v753, %v570
          %v778 = vmul.f32 %v755, %v575
          %v779 = vmul.f32 %v757, %v580
          %vm780 = vcmask 523520
          %v781 = vsel %vm780, %v772, 0.0
          %v782 = vsel %vm780, %v773, 0.0
          %v783 = vadd.f32 %v781, %v782
          %v784 = vsel %vm780, %v774, 0.0
          %v785 = vadd.f32 %v783, %v784
          %v786 = vsel %vm780, %v775, 0.0
          %v787 = vadd.f32 %v785, %v786
          %v788 = vsel %vm780, %v776, 0.0
          %v789 = vadd.f32 %v787, %v788
          %v790 = vsel %vm780, %v777, 0.0
          %v791 = vadd.f32 %v789, %v790
          %v792 = vsel %vm780, %v778, 0.0
          %v793 = vadd.f32 %v791, %v792
          %v794 = vsel %vm780, %v779, 0.0
          %v795 = vadd.f32 %v793, %v794
          %v796 = vrot.slane %v795, 4
          %v797 = vadd.f32 %v795, %v796
          %v798 = vrot.slane %v797, 2
          %v799 = vadd.f32 %v797, %v798
          %v800 = vrot.slane %v799, 1
          %v801 = vadd.f32 %v799, %v800
          %v802 = vmul.f32 %v801, %v771
          %v803 = vld [vmem:[%s3 + $0x60] sm:$0xff]
          %v804 = vld [vmem:[%s3 + $0x68] sm:$0xff]
          %v805 = vld [vmem:[%s3 + $0x70] sm:$0xff]
          %v806 = vld [vmem:[%s3 + $0x78] sm:$0xff]
          %808 = vrot.lane.b32.xlu0 %v802, 96
          %v809 = vpop.permute.xlu0 %808
          %v810 = vsel %vm256, %v809, 0
          %812 = vmatprep.subr.mxu0 0.0
          %813 = vmatpush1.msra.mxu0 0.0
          %814 = vmatprep.subr.mxu0 0.0
          %815 = vmatpush1.msra.mxu0 0.0
          %816 = vmatprep.subr.mxu0 0.0
          %817 = vmatpush1.msra.mxu0 0.0
          %818 = vmatprep.subr.mxu0 0.0
          %819 = vmatpush1.msra.mxu0 0.0
          %820 = vmatprep.subr.mxu0 0.0
          %821 = vmatpush1.msra.mxu0 0.0
          %822 = vmatprep.subr.mxu0 0.0
          %823 = vmatpush1.msra.mxu0 0.0
          %824 = vmatprep.subr.mxu0 0.0
          %825 = vmatpush1.msra.mxu0 0.0
          %826 = vmatprep.subr.mxu0 0.0
          %827 = vmatpush1.msra.mxu0 0.0
          %828 = vmatprep.subr.mxu0 0.0
          %829 = vmatpush1.msra.mxu0 0.0
          %830 = vmatprep.subr.mxu0 0.0
          %831 = vmatpush1.msra.mxu0 0.0
          %832 = vmatprep.subr.mxu0 0.0
          %833 = vmatpush1.msra.mxu0 0.0
          %834 = vmatprep.subr.mxu0 0.0
          %835 = vmatpush1.msra.mxu0 0.0
          %836 = vmatprep.subr.mxu0 0.0
          %837 = vmatpush1.msra.mxu0 %v806
          %838 = vmatprep.subr.mxu0 0.0
          %839 = vmatpush1.msra.mxu0 %v805
          %840 = vmatprep.subr.mxu0 0.0
          %841 = vmatpush1.msra.mxu0 %v804
          %842 = vmatprep.subr.mxu0 0.0
          %843 = vmatpush1.msra.mxu0 %v803
          %844 = vmatprep.subr.mxu0 0.0
          %845 = vmatpush2.msra.mxu0 0.0
          %846 = vmatprep.subr.mxu0 0.0
          %847 = vmatpush2.msra.mxu0 0.0
          %848 = vmatprep.subr.mxu0 0.0
          %849 = vmatpush2.msra.mxu0 0.0
          %850 = vmatprep.subr.mxu0 0.0
          %851 = vmatpush2.msra.mxu0 0.0
          %852 = vmatprep.subr.mxu0 0.0
          %853 = vmatpush2.msra.mxu0 0.0
          %854 = vmatprep.subr.mxu0 0.0
          %855 = vmatpush2.msra.mxu0 0.0
          %856 = vmatprep.subr.mxu0 0.0
          %857 = vmatpush2.msra.mxu0 0.0
          %858 = vmatprep.subr.mxu0 0.0
          %859 = vmatpush2.msra.mxu0 0.0
          %860 = vmatprep.subr.mxu0 0.0
          %861 = vmatpush2.msra.mxu0 0.0
          %862 = vmatprep.subr.mxu0 0.0
          %863 = vmatpush2.msra.mxu0 0.0
          %864 = vmatprep.subr.mxu0 0.0
          %865 = vmatpush2.msra.mxu0 0.0
          %866 = vmatprep.subr.mxu0 0.0
          %867 = vmatpush2.msra.mxu0 0.0
          %868 = vmatprep.subr.mxu0 0.0
          %869 = vmatpush2.msra.mxu0 0.0
          %870 = vmatprep.subr.mxu0 0.0
          %871 = vmatpush2.msra.mxu0 0.0
          %872 = vmatprep.subr.mxu0 0.0
          %873 = vmatpush2.msra.mxu0 0.0
          %874 = vmatprep.subr.mxu0 0.0
          %875 = vmatpush2.msra.mxu0 0.0
          %876 = vmatprep.mubr.f32.mxu0 0.0
          %877 = vmatmul.mubr.f32.gmra.mxu0 %v810
          %v878 = vpop.f32.mrf.mxu0
          %v879 = vadd.f32 0.0, %v878
          %v880 = vpop.f32.mrf.mxu0
          %881 = vdwg.mxu0
          %v882 = vadd.f32 %v449, %v879
          %v883 = vld [vmem:[%s188] sm:$0x1]
          %v884 = vadd.f32 %v882, %v883
          %v885 = vld [vmem:[%s3 + $0x80] sm:$0xff]
          %v886 = vld [vmem:[%s3 + $0x88] sm:$0xff]
          %v887 = vld [vmem:[%s3 + $0x90] sm:$0xff]
          %v888 = vld [vmem:[%s3 + $0x98] sm:$0xff]
          %v889 = vld [vmem:[%s3 + $0xa0] sm:$0xff]
          %v890 = vld [vmem:[%s3 + $0xa8] sm:$0xff]
          %v891 = vld [vmem:[%s3 + $0xb0] sm:$0xff]
          %v892 = vld [vmem:[%s3 + $0xb8] sm:$0xff]
          %v893 = vld [vmem:[%s3 + $0xc0] sm:$0xff]
          %v894 = vld [vmem:[%s3 + $0xc8] sm:$0xff]
          %v895 = vld [vmem:[%s3 + $0xd0] sm:$0xff]
          %v896 = vld [vmem:[%s3 + $0xd8] sm:$0xff]
          %v898 = vsel %vm256, %v884, 0
          %900 = vmatprep.subr.mxu0 0.0
          %901 = vmatpush1.msra.mxu0 0.0
          %902 = vmatprep.subr.mxu0 0.0
          %903 = vmatpush1.msra.mxu0 0.0
          %904 = vmatprep.subr.mxu0 0.0
          %905 = vmatpush1.msra.mxu0 0.0
          %906 = vmatprep.subr.mxu0 0.0
          %907 = vmatpush1.msra.mxu0 0.0
          %908 = vmatprep.subr.mxu0 0.0
          %909 = vmatpush1.msra.mxu0 0.0
          %910 = vmatprep.subr.mxu0 0.0
          %911 = vmatpush1.msra.mxu0 0.0
          %912 = vmatprep.subr.mxu0 0.0
          %913 = vmatpush1.msra.mxu0 0.0
          %914 = vmatprep.subr.mxu0 0.0
          %915 = vmatpush1.msra.mxu0 0.0
          %916 = vmatprep.subr.mxu0 0.0
          %917 = vmatpush1.msra.mxu0 0.0
          %918 = vmatprep.subr.mxu0 0.0
          %919 = vmatpush1.msra.mxu0 0.0
          %920 = vmatprep.subr.mxu0 0.0
          %921 = vmatpush1.msra.mxu0 0.0
          %922 = vmatprep.subr.mxu0 0.0
          %923 = vmatpush1.msra.mxu0 0.0
          %924 = vmatprep.subr.mxu0 0.0
          %925 = vmatpush1.msra.mxu0 %v888
          %926 = vmatprep.subr.mxu0 0.0
          %927 = vmatpush1.msra.mxu0 %v887
          %928 = vmatprep.subr.mxu0 0.0
          %929 = vmatpush1.msra.mxu0 %v886
          %930 = vmatprep.subr.mxu0 0.0
          %931 = vmatpush1.msra.mxu0 %v885
          %932 = vmatprep.subr.mxu0 0.0
          %933 = vmatpush2.msra.mxu0 0.0
          %934 = vmatprep.subr.mxu0 0.0
          %935 = vmatpush2.msra.mxu0 0.0
          %936 = vmatprep.subr.mxu0 0.0
          %937 = vmatpush2.msra.mxu0 0.0
          %938 = vmatprep.subr.mxu0 0.0
          %939 = vmatpush2.msra.mxu0 0.0
          %940 = vmatprep.subr.mxu0 0.0
          %941 = vmatpush2.msra.mxu0 0.0
          %942 = vmatprep.subr.mxu0 0.0
          %943 = vmatpush2.msra.mxu0 0.0
          %944 = vmatprep.subr.mxu0 0.0
          %945 = vmatpush2.msra.mxu0 0.0
          %946 = vmatprep.subr.mxu0 0.0
          %947 = vmatpush2.msra.mxu0 0.0
          %948 = vmatprep.subr.mxu0 0.0
          %949 = vmatpush2.msra.mxu0 0.0
          %950 = vmatprep.subr.mxu0 0.0
          %951 = vmatpush2.msra.mxu0 0.0
          %952 = vmatprep.subr.mxu0 0.0
          %953 = vmatpush2.msra.mxu0 0.0
          %954 = vmatprep.subr.mxu0 0.0
          %955 = vmatpush2.msra.mxu0 0.0
          %956 = vmatprep.subr.mxu0 0.0
          %957 = vmatpush2.msra.mxu0 0.0
          %958 = vmatprep.subr.mxu0 0.0
          %959 = vmatpush2.msra.mxu0 0.0
          %960 = vmatprep.subr.mxu0 0.0
          %961 = vmatpush2.msra.mxu0 0.0
          %962 = vmatprep.subr.mxu0 0.0
          %963 = vmatpush2.msra.mxu0 0.0
          %964 = vmatprep.mubr.f32.mxu0 0.0
          %965 = vmatmul.mubr.f32.gmra.mxu0 %v898
          %v966 = vpop.f32.mrf.mxu0
          %v967 = vadd.f32 0.0, %v966
          %v968 = vpop.f32.mrf.mxu0
          %969 = vdwg.mxu0
          %v970 = vmax.f32 %v967, 0.0
          %vm971 = vcmask 523264
          %v973 = vsel %vm971, %v970, 0
          %975 = vmatprep.subr.mxu0 0.0
          %976 = vmatpush1.msra.mxu0 0.0
          %977 = vmatprep.subr.mxu0 0.0
          %978 = vmatpush1.msra.mxu0 0.0
          %979 = vmatprep.subr.mxu0 0.0
          %980 = vmatpush1.msra.mxu0 0.0
          %981 = vmatprep.subr.mxu0 0.0
          %982 = vmatpush1.msra.mxu0 0.0
          %983 = vmatprep.subr.mxu0 0.0
          %984 = vmatpush1.msra.mxu0 0.0
          %985 = vmatprep.subr.mxu0 0.0
          %986 = vmatpush1.msra.mxu0 0.0
          %987 = vmatprep.subr.mxu0 0.0
          %988 = vmatpush1.msra.mxu0 0.0
          %989 = vmatprep.subr.mxu0 0.0
          %990 = vmatpush1.msra.mxu0 0.0
          %991 = vmatprep.subr.mxu0 0.0
          %992 = vmatpush1.msra.mxu0 %v896
          %993 = vmatprep.subr.mxu0 0.0
          %994 = vmatpush1.msra.mxu0 %v895
          %995 = vmatprep.subr.mxu0 0.0
          %996 = vmatpush1.msra.mxu0 %v894
          %997 = vmatprep.subr.mxu0 0.0
          %998 = vmatpush1.msra.mxu0 %v893
          %999 = vmatprep.subr.mxu0 0.0
          %1000 = vmatpush1.msra.mxu0 %v892
          %1001 = vmatprep.subr.mxu0 0.0
          %1002 = vmatpush1.msra.mxu0 %v891
          %1003 = vmatprep.subr.mxu0 0.0
          %1004 = vmatpush1.msra.mxu0 %v890
          %1005 = vmatprep.subr.mxu0 0.0
          %1006 = vmatpush1.msra.mxu0 %v889
          %1007 = vmatprep.subr.mxu0 0.0
          %1008 = vmatpush2.msra.mxu0 0.0
          %1009 = vmatprep.subr.mxu0 0.0
          %1010 = vmatpush2.msra.mxu0 0.0
          %1011 = vmatprep.subr.mxu0 0.0
          %1012 = vmatpush2.msra.mxu0 0.0
          %1013 = vmatprep.subr.mxu0 0.0
          %1014 = vmatpush2.msra.mxu0 0.0
          %1015 = vmatprep.subr.mxu0 0.0
          %1016 = vmatpush2.msra.mxu0 0.0
          %1017 = vmatprep.subr.mxu0 0.0
          %1018 = vmatpush2.msra.mxu0 0.0
          %1019 = vmatprep.subr.mxu0 0.0
          %1020 = vmatpush2.msra.mxu0 0.0
          %1021 = vmatprep.subr.mxu0 0.0
          %1022 = vmatpush2.msra.mxu0 0.0
          %1023 = vmatprep.subr.mxu0 0.0
          %1024 = vmatpush2.msra.mxu0 0.0
          %1025 = vmatprep.subr.mxu0 0.0
          %1026 = vmatpush2.msra.mxu0 0.0
          %1027 = vmatprep.subr.mxu0 0.0
          %1028 = vmatpush2.msra.mxu0 0.0
          %1029 = vmatprep.subr.mxu0 0.0
          %1030 = vmatpush2.msra.mxu0 0.0
          %1031 = vmatprep.subr.mxu0 0.0
          %1032 = vmatpush2.msra.mxu0 0.0
          %1033 = vmatprep.subr.mxu0 0.0
          %1034 = vmatpush2.msra.mxu0 0.0
          %1035 = vmatprep.subr.mxu0 0.0
          %1036 = vmatpush2.msra.mxu0 0.0
          %1037 = vmatprep.subr.mxu0 0.0
          %1038 = vmatpush2.msra.mxu0 0.0
          %1039 = vmatprep.mubr.f32.mxu0 0.0
          %1040 = vmatmul.mubr.f32.gmra.mxu0 %v973
          %v1041 = vpop.f32.mrf.mxu0
          %v1042 = vadd.f32 0.0, %v1041
          %v1043 = vpop.f32.mrf.mxu0
          %1044 = vdwg.mxu0
          %v1045 = vadd.f32 %v884, %v1042
          %v1046 = vld [vmem:[%s3 + $0xe0] sm:$0xff]
          %v1047 = vld [vmem:[%s3 + $0xe8] sm:$0xff]
          %v1048 = vld [vmem:[%s3 + $0xf0] sm:$0xff]
          %v1049 = vld [vmem:[%s3 + $0xf8] sm:$0xff]
          %v1050 = vld [vmem:[%s3 + $0x100] sm:$0xff]
          %v1052 = vsel %vm256, %v1045, 0
          %1054 = vmatprep.subr.mxu0 0.0
          %1055 = vmatpush1.msra.mxu0 0.0
          %1056 = vmatprep.subr.mxu0 0.0
          %1057 = vmatpush1.msra.mxu0 0.0
          %1058 = vmatprep.subr.mxu0 0.0
          %1059 = vmatpush1.msra.mxu0 0.0
          %1060 = vmatprep.subr.mxu0 0.0
          %1061 = vmatpush1.msra.mxu0 0.0
          %1062 = vmatprep.subr.mxu0 0.0
          %1063 = vmatpush1.msra.mxu0 0.0
          %1064 = vmatprep.subr.mxu0 0.0
          %1065 = vmatpush1.msra.mxu0 0.0
          %1066 = vmatprep.subr.mxu0 0.0
          %1067 = vmatpush1.msra.mxu0 0.0
          %1068 = vmatprep.subr.mxu0 0.0
          %1069 = vmatpush1.msra.mxu0 0.0
          %1070 = vmatprep.subr.mxu0 0.0
          %1071 = vmatpush1.msra.mxu0 0.0
          %1072 = vmatprep.subr.mxu0 0.0
          %1073 = vmatpush1.msra.mxu0 0.0
          %1074 = vmatprep.subr.mxu0 0.0
          %1075 = vmatpush1.msra.mxu0 0.0
          %1076 = vmatprep.subr.mxu0 0.0
          %1077 = vmatpush1.msra.mxu0 0.0
          %1078 = vmatprep.subr.mxu0 0.0
          %1079 = vmatpush1.msra.mxu0 %v1049
          %1080 = vmatprep.subr.mxu0 0.0
          %1081 = vmatpush1.msra.mxu0 %v1048
          %1082 = vmatprep.subr.mxu0 0.0
          %1083 = vmatpush1.msra.mxu0 %v1047
          %1084 = vmatprep.subr.mxu0 0.0
          %1085 = vmatpush1.msra.mxu0 %v1046
          %1086 = vmatprep.subr.mxu0 0.0
          %1087 = vmatpush2.msra.mxu0 0.0
          %1088 = vmatprep.subr.mxu0 0.0
          %1089 = vmatpush2.msra.mxu0 0.0
          %1090 = vmatprep.subr.mxu0 0.0
          %1091 = vmatpush2.msra.mxu0 0.0
          %1092 = vmatprep.subr.mxu0 0.0
          %1093 = vmatpush2.msra.mxu0 0.0
          %1094 = vmatprep.subr.mxu0 0.0
          %1095 = vmatpush2.msra.mxu0 0.0
          %1096 = vmatprep.subr.mxu0 0.0
          %1097 = vmatpush2.msra.mxu0 0.0
          %1098 = vmatprep.subr.mxu0 0.0
          %1099 = vmatpush2.msra.mxu0 0.0
          %1100 = vmatprep.subr.mxu0 0.0
          %1101 = vmatpush2.msra.mxu0 0.0
          %1102 = vmatprep.subr.mxu0 0.0
          %1103 = vmatpush2.msra.mxu0 0.0
          %1104 = vmatprep.subr.mxu0 0.0
          %1105 = vmatpush2.msra.mxu0 0.0
          %1106 = vmatprep.subr.mxu0 0.0
          %1107 = vmatpush2.msra.mxu0 0.0
          %1108 = vmatprep.subr.mxu0 0.0
          %1109 = vmatpush2.msra.mxu0 0.0
          %1110 = vmatprep.subr.mxu0 0.0
          %1111 = vmatpush2.msra.mxu0 0.0
          %1112 = vmatprep.subr.mxu0 0.0
          %1113 = vmatpush2.msra.mxu0 0.0
          %1114 = vmatprep.subr.mxu0 0.0
          %1115 = vmatpush2.msra.mxu0 0.0
          %1116 = vmatprep.subr.mxu0 0.0
          %1117 = vmatpush2.msra.mxu0 0.0
          %1118 = vmatprep.mubr.f32.mxu0 0.0
          %1119 = vmatmul.mubr.f32.gmra.mxu0 %v1052
          %v1120 = vpop.f32.mrf.mxu0
          %v1121 = vadd.f32 %v1050, %v1120
          %v1122 = vpop.f32.mrf.mxu0
          %1123 = vdwg.mxu0
          %vm1124 = vcmask 253952
          %v1125 = vsel %vm1124, %v1121, -inf
          %1126 = vmax.xlane.f32.xlu0 %v1125
          %v1127 = vpop.xlane.xlu0 %1126
          %v1128 = vsub.f32 %v1121, %v1127
          %v1129 = vmul.f32 %v1128, 1.442695
          %v1130 = vpow.pop %v1129
          %v1131 = vsel %vm1124, %v1130, 0.0
          %1132 = vadd.xlane.f32.xlu0 %v1131
          %v1133 = vpop.xlane.xlu0 %1132
          %v1134 = vlog2.pop %v1133
          %v1135 = vmul.f32 %v1134, 0.6931472
          %v1136 = vadd.f32 %v1135, %v1127
          %v1137 = vsub.f32 %v1121, %v1136
          %1138 = vst.msk [vmem:[%s180] sm:$0x1] %vm1124, %v1137
        $region36: #{_lambda_.1} parent=31 // pred_fallthru
          _
        %s1139 = sand.u32 %s105, 1
        %s1140 = scalar_lea.sflag [#allocation5], %s1139
        %s1141 = sand.u32 %s105, 1
        %s1142 = scalar_lea.vmem [#allocation4], %s1141
        // Predicated region
        $region37: #{_lambda_.1} parent=31 // pred_check
          %p1143 = pneg %p115
        $region38: #{_lambda_.1} parent=31 // pred_check_branch
          %1145 = sbr.rel (%p1143) target = $region40
        $region39: #{_lambda_.1} parent=31 // pred_region
          %s1147 = ssub.s32 16, 16
          %1148 = vsyncadd %s1140, %s1147
          %s1149 = smul.addr %s24, 16
          %s1150 = scalar_lea.hbm %s4, %s1149
          %s1152 = sshll.u32 %s1142, 4
          %s1153 = int_to_ptr.vmem [resolvable:$true] %s1152
          %1155 = dma.vmem_to_hbm [thread:$0]  %s1153, 16, %s1150, %s1140
        $region40: #{_lambda_.1} parent=31 // pred_fallthru
          _
      $region32: #{_lambda_.1} parent=5 // pred_fallthru
        _
      %p1156 = scmp.le.s32.totalorder 2, %s19
      // Predicated region
      $region41: #{_lambda_.1} parent=5 // pred_check
        %p1157 = pneg %p1156
      $region42: #{_lambda_.1} parent=5 // pred_check_branch
        %1159 = sbr.rel (%p1157) target = $region44
      $region43: #{_lambda_.1} parent=5 // pred_region
        %s1160 = ssub.s32 %s19, 2
        // Predicated region
        $region45: #{_lambda_.1} parent=43 // pred_check
          %p1161 = pneg %p121
        $region46: #{_lambda_.1} parent=43 // pred_check_branch
          %1163 = sbr.rel (%p1161) target = $region48
        $region47: #{_lambda_.1} parent=43 // pred_region
          %s1164 = sand.u32 %s106, 1
          %s1165 = scalar_lea.sflag [#allocation5], %s1164
          %s1166 = sand.u32 %s106, 1
          %s1167 = scalar_lea.vmem [#allocation4], %s1166
          %1168 = dma.done %s1165, 16
        $region48: #{_lambda_.1} parent=43 // pred_fallthru
          _
      $region44: #{_lambda_.1} parent=5 // pred_fallthru
        _
    $region6: #{_lambda_.1} parent=1 // loop_footer
      %s23 = sadd.s32 1, %s19
    $region7: #{_lambda_.1} parent=1 // loop_footer_branch
      %18 = sbr.rel target = $region3
    $region8: #{_lambda_.1} parent=1 // loop_exit
      _
    %1169 = vsyncpa [#allocation5], 1
    %s1170 = scalar_lea.sflag [#allocation5], 1
    %1171 = vsyncpa %s1170, 1

</llo_original>
